<compile_context>
chip_gen: v6e
topology: v6e:2x2x1
jax: 0.10.0
libtpu: 0.0.40
codegen_flags: <defaults>
</compile_context>

<pallas_src>
import jax
import jax.numpy as jnp
from jax import lax
from jax.experimental import pallas as pl
from jax.experimental.pallas import tpu as pltpu


def _round_up(n, m):
    return ((n + m - 1) // m) * m


def _round_down(n, m):
    return (n // m) * m


def _choose_tm(bp, dp, vmem_cap):
    """Pick the batch-tile row count by tile BYTES, not row count.

    Targets ~1-4 MiB x blocks, keeps tm a multiple of 128 (lane-dense output
    block => unmasked stores), caps the double-buffered footprint by the
    per-generation VMEM capacity, and guarantees >= 2 grid blocks on large
    batches so both v7x TensorCores get work.
    """
    bytes_per_row = 4 * dp
    target_bytes = min(2 << 20, max(1 << 20, vmem_cap // 16))
    block_budget = min(4 << 20, vmem_cap // 8)        # per x buffer (x is double-buffered)
    tm = _round_down(min(target_bytes, block_budget) // bytes_per_row, 128)
    tm = max(tm, 128)
    # v7x megacore: keep >= 2 blocks when the batch splits into two lane-dense
    # (>=128 column) halves; harmless no-op on v5e/v6e (single TensorCore).
    if bp >= 256:
        tm = min(tm, _round_up(pl.cdiv(bp, 2), 128))
    if tm >= bp:
        tm = bp   # one exact full block (block == full array dims is always legal)
    return tm


def _linear_sigmoid_kernel(x_ref, w_ref, b_ref, o_ref):
    # x_ref: (TM, Dp) VMEM batch tile; w_ref: (P, Dp) VMEM resident weight
    # (block-diagonal when lane-packing); b_ref: (1, 1) SMEM scalar bias;
    # o_ref: (P, TM) VMEM lane-dense output tile.
    logits = lax.dot_general(
        w_ref[...],                                   # (P, Dp)
        x_ref[...],                                   # (TM, Dp)
        dimension_numbers=(((1,), (1,)), ((), ())),   # contract over Dp -> (P, TM)
        preferred_element_type=jnp.float32,
    )
    o_ref[...] = jax.nn.sigmoid(logits + b_ref[0, 0]).astype(o_ref.dtype)


def linear_sigmoid(x, weight, bias):
    """sigmoid(x @ weight.T + bias), matching torch.sigmoid(nn.Linear(D, 1)(x)).

    x: (B, D) f32, weight: (1, D) f32, bias: (1,) f32 -> (B, 1) f32.
    """
    B, D = x.shape
    assert weight.shape == (1, D)
    assert bias.shape == (1,)
    x = x.astype(jnp.float32)
    weight = weight.astype(jnp.float32)

    # ---- lane packing: fold 128//D consecutive batch rows into one lane row.
    pack = 1
    if D < 128 and 128 % D == 0 and B % (128 // D) == 0:
        pack = 128 // D
    bp, dp = B // pack, D * pack
    x_view = x.reshape(bp, dp)                        # free row-major reshape
    if pack == 1:
        w_packed = weight
    else:
        # Row j of the packed weight carries w in lane slot [j*D, (j+1)*D).
        w_packed = (jnp.eye(pack, dtype=jnp.float32)[:, :, None]
                    * weight[0][None, None, :]).reshape(pack, dp)
    bias2d = bias.reshape(1, 1).astype(jnp.float32)

    # ---- tile sizing by bytes + per-generation VMEM budget.
    try:
        vmem_cap = int(pltpu.get_tpu_info().vmem_capacity_bytes)
    except Exception:
        vmem_cap = 64 << 20                            # conservative (v7x per-TC)
    tm = _choose_tm(bp, dp, vmem_cap)
    grid = (pl.cdiv(bp, tm),)
    n_lanes = grid[0] * tm                             # output lane extent (>= bp)

    # Explicit scoped-VMEM limit (v5e's default is only 16 MiB despite 128 MiB
    # physical; v7x has only 64 MiB physical).
    vmem_need = 4 * (2 * tm * dp + 2 * pack * tm + 2 * pack * dp) + (1 << 20)
    vmem_limit = int(min(vmem_cap, max(2 * vmem_need, 16 << 20)))

    out = pl.pallas_call(
        _linear_sigmoid_kernel,
        out_shape=jax.ShapeDtypeStruct((pack, n_lanes), jnp.float32),
        grid=grid,
        in_specs=[
            pl.BlockSpec((tm, dp), lambda i: (i, 0)),           # x: streamed over batch
            pl.BlockSpec((pack, dp), lambda i: (0, 0)),         # weight: resident
            pl.BlockSpec(memory_space=pltpu.MemorySpace.SMEM),  # bias scalar
        ],
        out_specs=pl.BlockSpec((pack, tm), lambda i: (0, i)),   # lane-dense output
        compiler_params=pltpu.CompilerParams(
            dimension_semantics=("parallel",),
            vmem_limit_bytes=vmem_limit,
        ),
        cost_estimate=pl.CostEstimate(
            flops=2 * B * D,
            transcendentals=B,
            bytes_accessed=B * D * 4 + D * 4 + B * 4,
        ),
    )(x_view, w_packed, bias2d)

    # out[j, r] = sigmoid(w . x[pack*r + j] + b); transpose+reshape restores
    # batch order.  Lanes >= bp hold discarded boundary-block values.
    return out[:, :bp].T.reshape(B, 1)


if __name__ == "__main__":
    key = jax.random.PRNGKey(0)
    k_x, k_w, k_b, k_x2, k_x3 = jax.random.split(key, 5)

    input_size = 32  # corresponds to X_train.shape[1]
    bound = 1.0 / jnp.sqrt(input_size)
    weight = jax.random.uniform(
        k_w, (1, input_size), dtype=jnp.float32, minval=-bound, maxval=bound
    )
    bias = jax.random.uniform(
        k_b, (1,), dtype=jnp.float32, minval=-bound, maxval=bound
    )

    def check(xk, batch):
        x = jax.random.normal(xk, (batch, input_size), dtype=jnp.float32)
        out = jax.block_until_ready(linear_sigmoid(x, weight, bias))
        ref = jax.nn.sigmoid(x @ weight.T + bias)
        assert out.shape == (batch, 1)
        assert jnp.allclose(out, ref, atol=1e-5, rtol=1e-5)

    # Primary demo shape (lane-packed path, single full block).
    check(k_x, 8)
    # pack=1 fallback (batch not divisible by 128//D), single full block.
    check(k_x2, 9)
    # multi-block batch-parallel path (2 grid blocks, lane-packed).
    check(k_x3, 1024)

    print("KERNEL_OK")
</pallas_src>

<mosaic_0001>
module attributes {stable_mosaic.version = 11 : i64} {
  func.func @_linear_sigmoid_kernel(%arg0: i32, %arg1: memref<2x128xf32, #tpu.memory_space<vmem>>, %arg2: memref<4x128xf32, #tpu.memory_space<vmem>>, %arg3: memref<1x1xf32, #tpu.memory_space<smem>>, %arg4: memref<4x2xf32, #tpu.memory_space<vmem>>) attributes {dimension_semantics = [#tpu.dimension_semantics<parallel>], iteration_bounds = array<i64: 1>, scalar_prefetch = 0 : i64, scratch_operands = 0 : i64, tpu.core_type = #tpu.core_type<tc>, window_params = [{transform_indices = @transform_0, window_bounds = array<i64: 2, 128>}, {pipeline_mode = #tpu.pipeline_mode<synchronous>, transform_indices = @transform_1, window_bounds = array<i64: 4, 128>}, {transform_indices = @transform_2, window_bounds = array<i64: 1, 1>}, {transform_indices = @transform_3, window_bounds = array<i64: 4, 2>}]} {
    %c0 = arith.constant 0 : index
    %c0_0 = arith.constant 0 : index
    %0 = vector.load %arg2[%c0, %c0_0] : memref<4x128xf32, #tpu.memory_space<vmem>>, vector<4x128xf32>
    %c0_1 = arith.constant 0 : index
    %c0_2 = arith.constant 0 : index
    %1 = vector.load %arg1[%c0_1, %c0_2] : memref<2x128xf32, #tpu.memory_space<vmem>>, vector<2x128xf32>
    %cst = arith.constant dense<0.000000e+00> : vector<4x2xf32>
    %2 = tpu.matmul %0, %1, %cst {dimension_numbers = #tpu.dot_dimension_numbers<[1], [1], [0], [0], [0, 0, 1, 0], [], []>} : vector<4x128xf32>, vector<2x128xf32>, vector<4x2xf32> -> vector<4x2xf32>
    %c0_3 = arith.constant 0 : index
    %c0_4 = arith.constant 0 : index
    %3 = memref.load %arg3[%c0_3, %c0_4] : memref<1x1xf32, #tpu.memory_space<smem>>
    %4 = vector.broadcast %3 : f32 to vector<4x2xf32>
    %5 = arith.addf %2, %4 : vector<4x2xf32>
    %6 = arith.negf %5 : vector<4x2xf32>
    %7 = math.exp %6 : vector<4x2xf32>
    %cst_5 = arith.constant 1.000000e+00 : f32
    %8 = vector.broadcast %cst_5 : f32 to vector<4x2xf32>
    %9 = arith.addf %8, %7 : vector<4x2xf32>
    %10 = arith.divf %8, %9 : vector<4x2xf32>
    %c0_6 = arith.constant 0 : index
    %c0_7 = arith.constant 0 : index
    %11 = vector.load %arg4[%c0_6, %c0_7] : memref<4x2xf32, #tpu.memory_space<vmem>>, vector<4x2xf32>
    tpu.vector_store %arg4[%c0_6, %c0_7], %10 {strides = array<i32>} : memref<4x2xf32, #tpu.memory_space<vmem>>, vector<4x2xf32>,
    return
  }
  func.func @transform_0(%arg0: i32) -> (i32, i32) {
    %c0_i32 = arith.constant 0 : i32
    %c0_i32_0 = arith.constant 0 : i32
    return %arg0, %c0_i32 : i32, i32
  }
  func.func @transform_1(%arg0: i32) -> (i32, i32) {
    %c0_i32 = arith.constant 0 : i32
    %c0_i32_0 = arith.constant 0 : i32
    %c0_i32_1 = arith.constant 0 : i32
    return %c0_i32, %c0_i32_0 : i32, i32
  }
  func.func @transform_2(%arg0: i32) -> (i32, i32) {
    %c0_i32 = arith.constant 0 : i32
    %c0_i32_0 = arith.constant 0 : i32
    %c0_i32_1 = arith.constant 0 : i32
    return %c0_i32, %c0_i32_0 : i32, i32
  }
  func.func @transform_3(%arg0: i32) -> (i32, i32) {
    %c0_i32 = arith.constant 0 : i32
    %c0_i32_0 = arith.constant 0 : i32
    return %c0_i32, %arg0 : i32, i32
  }
}

</mosaic_0001>

<llo_original>
// kernel: tpu_custom_call.1
$region0: #{tpu_custom_call.1}
  #allocation0 [shape = 'u32[]', space=smem, size = 0x4, offset = 0x4, fixed_abs, tag = 'smem constant byte address 0x4 - core index']
  #allocation1 [shape = 'u32[144,128]{1,0:T(1,128)}', space=vmem, size = 0x12000, scoped, tag = 'internal scratch']
  #allocation2 [shape = 'f32[1,1]{1,0:T(1,128)S(6)}', space=smem, size = 0x200, scoped, tag = 'scoped memory for tpu_custom_call.1']
  %s0 = inlined_call_operand.vmem [shape: f32[2,128], index: 0, kind: input, shape index: {}]
  %s1 = inlined_call_operand.hbm [shape: f32[4,128], index: 1, kind: input, shape index: {}]
  %s2 = inlined_call_operand.<no memory space> [shape: f32[1,1], index: 2, kind: input, shape index: {}]
  %s3 = inlined_call_operand.vmem [shape: f32[4,2], index: 3, kind: output, shape index: {}]
  %s4 = sld [smem:[#allocation0]]
  $region26: #{tpu_custom_call.1} parent=0
    _
  %s6 = ssub.s32 1, %s4
  %s7 = scalar_select 0, %s6, %s4
  %8 = sst [smem:[#allocation2]] %s2
  $region1: #{tpu_custom_call.1} parent=0
    #allocation3 [shape = 'u8[2048]{0}', space=vmem, size = 0x800, scoped, tag = 'input window, operand 1, single buffered']
    #allocation4 [shape = 's32[1]{0}', space=sflag, size = 0x4, scoped, tag = 'scoped memory for tpu_custom_call.1']
    %9 = vsyncpa [#allocation4], 0
    // Predicated region
    $region2: #{tpu_custom_call.1} parent=1 // pred_check
      _
    $region3: #{tpu_custom_call.1} parent=1 // pred_check_branch
      %11 = sbr.rel (0) target = $region5
    $region4: #{tpu_custom_call.1} parent=1 // pred_region
      _
    $region5: #{tpu_custom_call.1} parent=1 // pred_fallthru
      _
    // Predicated region
    $region6: #{tpu_custom_call.1} parent=1 // pred_check
      _
    $region7: #{tpu_custom_call.1} parent=1 // pred_check_branch
      %13 = sbr.rel (0) target = $region9
    $region8: #{tpu_custom_call.1} parent=1 // pred_region
      %s15 = ssub.s32 64, 64
      %16 = vsyncadd [#allocation4], %s15
      %s18 = sshll.u32 [#allocation3], 4
      %s19 = int_to_ptr.vmem [resolvable:$true] %s18
      %21 = dma.hbm_to_vmem [thread:$0]  %s1, 64, %s19, [#allocation4]
    $region9: #{tpu_custom_call.1} parent=1 // pred_fallthru
      _
    // Predicated region
    $region10: #{tpu_custom_call.1} parent=1 // pred_check
      _
    $region11: #{tpu_custom_call.1} parent=1 // pred_check_branch
      %23 = sbr.rel (0) target = $region13
    $region12: #{tpu_custom_call.1} parent=1 // pred_region
      _
    $region13: #{tpu_custom_call.1} parent=1 // pred_fallthru
      _
    // Predicated region
    $region14: #{tpu_custom_call.1} parent=1 // pred_check
      _
    $region15: #{tpu_custom_call.1} parent=1 // pred_check_branch
      %25 = sbr.rel (0) target = $region17
    $region16: #{tpu_custom_call.1} parent=1 // pred_region
      %26 = dma.done [#allocation4], 64
    $region17: #{tpu_custom_call.1} parent=1 // pred_fallthru
      _
    %v27 = vld [vmem:[#allocation3] sm:$0xf]
    %v28 = vld [vmem:[%s0] sm:$0x3]
    %s29 = sld [smem:[#allocation2]]
    %v30 = vstv %s29
    %31 = vmatprep.subr.mxu0 0.0
    %32 = vmatpush1.xpose.msra.mxu0 0.0
    %33 = vmatprep.subr.mxu0 0.0
    %34 = vmatpush1.xpose.msra.mxu0 0.0
    %35 = vmatprep.subr.mxu0 0.0
    %36 = vmatpush1.xpose.msra.mxu0 0.0
    %37 = vmatprep.subr.mxu0 0.0
    %38 = vmatpush1.xpose.msra.mxu0 0.0
    %39 = vmatprep.subr.mxu0 0.0
    %40 = vmatpush1.xpose.msra.mxu0 0.0
    %41 = vmatprep.subr.mxu0 0.0
    %42 = vmatpush1.xpose.msra.mxu0 0.0
    %43 = vmatprep.subr.mxu0 0.0
    %44 = vmatpush1.xpose.msra.mxu0 0.0
    %45 = vmatprep.subr.mxu0 0.0
    %46 = vmatpush1.xpose.msra.mxu0 0.0
    %47 = vmatprep.subr.mxu0 0.0
    %48 = vmatpush1.xpose.msra.mxu0 0.0
    %49 = vmatprep.subr.mxu0 0.0
    %50 = vmatpush1.xpose.msra.mxu0 0.0
    %51 = vmatprep.subr.mxu0 0.0
    %52 = vmatpush1.xpose.msra.mxu0 0.0
    %53 = vmatprep.subr.mxu0 0.0
    %54 = vmatpush1.xpose.msra.mxu0 0.0
    %55 = vmatprep.subr.mxu0 0.0
    %56 = vmatpush1.xpose.msra.mxu0 0.0
    %57 = vmatprep.subr.mxu0 0.0
    %58 = vmatpush1.xpose.msra.mxu0 0.0
    %59 = vmatprep.subr.mxu0 0.0
    %60 = vmatpush1.xpose.msra.mxu0 0.0
    %61 = vmatprep.subr.mxu0 0.0
    %62 = vmatpush1.xpose.msra.mxu0 %v28
    %63 = vmatprep.subr.mxu0 0.0
    %64 = vmatpush2.xpose.msra.mxu0 0.0
    %65 = vmatprep.subr.mxu0 0.0
    %66 = vmatpush2.xpose.msra.mxu0 0.0
    %67 = vmatprep.subr.mxu0 0.0
    %68 = vmatpush2.xpose.msra.mxu0 0.0
    %69 = vmatprep.subr.mxu0 0.0
    %70 = vmatpush2.xpose.msra.mxu0 0.0
    %71 = vmatprep.subr.mxu0 0.0
    %72 = vmatpush2.xpose.msra.mxu0 0.0
    %73 = vmatprep.subr.mxu0 0.0
    %74 = vmatpush2.xpose.msra.mxu0 0.0
    %75 = vmatprep.subr.mxu0 0.0
    %76 = vmatpush2.xpose.msra.mxu0 0.0
    %77 = vmatprep.subr.mxu0 0.0
    %78 = vmatpush2.xpose.msra.mxu0 0.0
    %79 = vmatprep.subr.mxu0 0.0
    %80 = vmatpush2.xpose.msra.mxu0 0.0
    %81 = vmatprep.subr.mxu0 0.0
    %82 = vmatpush2.xpose.msra.mxu0 0.0
    %83 = vmatprep.subr.mxu0 0.0
    %84 = vmatpush2.xpose.msra.mxu0 0.0
    %85 = vmatprep.subr.mxu0 0.0
    %86 = vmatpush2.xpose.msra.mxu0 0.0
    %87 = vmatprep.subr.mxu0 0.0
    %88 = vmatpush2.xpose.msra.mxu0 0.0
    %89 = vmatprep.subr.mxu0 0.0
    %90 = vmatpush2.xpose.msra.mxu0 0.0
    %91 = vmatprep.subr.mxu0 0.0
    %92 = vmatpush2.xpose.msra.mxu0 0.0
    %93 = vmatprep.subr.mxu0 0.0
    %94 = vmatpush2.xpose.msra.mxu0 0.0
    %95 = vmatprep.mubr.f32.mxu0 0.0
    %96 = vmatmul.mubr.f32.gmra.mxu0 %v27
    %v97 = vpop.f32.mrf.mxu0
    %v98 = vadd.f32 %v30, %v97
    %v99 = vpop.f32.mrf.mxu0
    %100 = vdwg.mxu0
    %v101 = vxor.u32 %v98, 2147483648
    %v102 = vmul.f32 %v101, 1.442695
    %v103 = vpow.pop %v102
    %v104 = vadd.f32 %v103, 1.0
    %v105 = vrcp.pop %v104
    %v106 = vmul.f32 1.0, %v105
    %vm107 = vcmask 11264
    %108 = vst.msk [vmem:[%s3] sm:$0xf] %vm107, %v106
    // Predicated region
    $region18: #{tpu_custom_call.1} parent=1 // pred_check
      _
    $region19: #{tpu_custom_call.1} parent=1 // pred_check_branch
      %110 = sbr.rel (0) target = $region21
    $region20: #{tpu_custom_call.1} parent=1 // pred_region
      _
    $region21: #{tpu_custom_call.1} parent=1 // pred_fallthru
      _
    // Predicated region
    $region22: #{tpu_custom_call.1} parent=1 // pred_check
      _
    $region23: #{tpu_custom_call.1} parent=1 // pred_check_branch
      %112 = sbr.rel (0) target = $region25
    $region24: #{tpu_custom_call.1} parent=1 // pred_region
      _
    $region25: #{tpu_custom_call.1} parent=1 // pred_fallthru
      _
    %113 = vsyncpa [#allocation4], 1

</llo_original>
